<compile_context>
chip_gen: v7x
topology: tpu7x:2x2x1
jax: 0.10.0
libtpu: 0.0.40
codegen_flags: <defaults>
</compile_context>

<pallas_src>
import functools

import jax
import jax.numpy as jnp
from jax import lax
from jax.experimental import pallas as pl
from jax.experimental.pallas import tpu as pltpu


# ----------------------------------------------------------------------------
# Padding / tile planning helpers
# ----------------------------------------------------------------------------
_LANE = 128
_NODE_PAD = 256                    # pad node counts to a multiple of this
_TILE_CAP = 2048                   # largest tile used on any axis
_VMEM_BUDGET = 28 * 1024 * 1024    # conservative pipelined-VMEM budget (v7x-safe)


def _round_up(x: int, m: int) -> int:
    return ((x + m - 1) // m) * m


def _pad_2d(x, rows: int, cols: int):
    r, c = x.shape
    return jnp.pad(x, ((0, rows - r), (0, cols - c)))


def _choose_tile(n_padded: int, cap: int) -> int:
    """Largest multiple of 128 that divides n_padded and is <= cap."""
    t = (min(cap, n_padded) // _LANE) * _LANE
    while t > _LANE and n_padded % t != 0:
        t -= _LANE
    return max(t, _LANE)


def _fused_vmem_bytes(t_r: int, t_c: int, n_r_p: int, d: int) -> int:
    # Conservative: assume double-buffering on every operand.
    return 2 * (t_r * t_c * 2      # A tile (bf16)
                + t_c * d * 2      # col-side x tile (bf16)
                + d * t_r * 2      # row-side x^T tile (bf16)
                + d * t_c * 4      # col-side (transposed) out tile (f32)
                + n_r_p * d * 4)   # VMEM-resident row-side accumulator (f32)


def _plan_fused(n_r_p: int, n_c_p: int, d: int):
    """(t_r, t_c, vmem_limit_bytes) for the fused hop, or None if the resident
    row accumulator cannot fit the VMEM budget."""
    cap = _TILE_CAP
    while cap >= _LANE:
        t_r = _choose_tile(n_r_p, cap)
        t_c = _choose_tile(n_c_p, cap)
        need = _fused_vmem_bytes(t_r, t_c, n_r_p, d)
        if need <= _VMEM_BUDGET:
            limit = int(min(max(need + (8 << 20), 32 << 20), 64 << 20))
            return t_r, t_c, limit
        cap //= 2
    return None


def _matmul_vmem_bytes(t_m: int, t_k: int, d: int) -> int:
    return 2 * (t_m * t_k * 2 + t_k * d * 2 + t_m * d * 4)


def _plan_matmul(m_p: int, k_p: int, d: int):
    cap = _TILE_CAP
    while cap >= _LANE:
        t_m = _choose_tile(m_p, cap)
        t_k = _choose_tile(k_p, cap)
        need = _matmul_vmem_bytes(t_m, t_k, d)
        if need <= _VMEM_BUDGET:
            limit = int(min(max(need + (8 << 20), 32 << 20), 64 << 20))
            return t_m, t_k, limit
        cap //= 2
    return _LANE, _LANE, 32 << 20


# ----------------------------------------------------------------------------
# Fused hop kernel: one pass over A computes BOTH sides of a LightGCN hop.
#
#   grid = (C, R)      C = col tiles of A (outer), R = row tiles (inner)
#   a_ref        (t_r, t_c)  bf16  A tile at block (r, c)
#   colx_ref     (t_c, d)    bf16  col-side embeddings (fetched once per c)
#   rowxt_ref    (d, t_r)    bf16  row-side embeddings, pre-transposed tile
#   row_out_ref  (n_r, d)    f32   VMEM-resident accumulator:  A   @ col_x
#   colt_out_ref (d, t_c)    f32   per-c accumulator:         (A^T @ row_x)^T
# ----------------------------------------------------------------------------
def _fused_hop_kernel(a_ref, colx_ref, rowxt_ref, row_out_ref, colt_out_ref,
                      *, t_r):
    c = pl.program_id(0)   # outer: col tile
    r = pl.program_id(1)   # inner: row tile

    @pl.when(jnp.logical_and(c == 0, r == 0))
    def _():
        row_out_ref[...] = jnp.zeros_like(row_out_ref)

    @pl.when(r == 0)
    def _():
        colt_out_ref[...] = jnp.zeros_like(colt_out_ref)

    a = a_ref[...]                                            # (t_r, t_c) bf16

    # Col-side update, kept transposed so the matmul is MXU-native (no
    # transposed-LHS contraction, hence no hidden XLU transpose of A tiles):
    #   (d, t_c) += row_x_tile^T @ A_tile
    colt_out_ref[...] += jnp.dot(rowxt_ref[...], a,
                                 preferred_element_type=jnp.float32)

    # Row-side update into rows [r*t_r, (r+1)*t_r) of the resident accumulator:
    #   (t_r, d) += A_tile @ col_x_tile
    off = pl.multiple_of(r * t_r, t_r)
    row_out_ref[pl.ds(off, t_r), :] += jnp.dot(
        a, colx_ref[...], preferred_element_type=jnp.float32)


def _fused_hop(mat, row_x, col_x, t_r, t_c, vmem_limit_bytes):
    """One LightGCN hop reading the adjacency `mat` from HBM exactly once.

      new_row_x = mat   @ col_x    (VMEM-resident f32 accumulator)
      new_col_x = mat^T @ row_x    (computed as row_x^T @ mat, transposed back
                                    outside the kernel — negligible traffic)
    """
    n_r, n_c = mat.shape
    d = col_x.shape[1]
    col_b = col_x.astype(jnp.bfloat16)
    row_t = row_x.astype(jnp.bfloat16).T            # (d, n_r) MXU-native operand

    grid = (n_c // t_c, n_r // t_r)                 # (col tiles outer, row inner)
    kernel = functools.partial(_fused_hop_kernel, t_r=t_r)

    row_out, col_out_t = pl.pallas_call(
        kernel,
        grid_spec=pltpu.PrefetchScalarGridSpec(
            num_scalar_prefetch=0,
            grid=grid,
            in_specs=[
                pl.BlockSpec((t_r, t_c), lambda c, r: (r, c)),   # A tiles
                pl.BlockSpec((t_c, d), lambda c, r: (c, 0)),     # col_x: 1 pass
                pl.BlockSpec((d, t_r), lambda c, r: (0, r)),     # row_x^T tiles
            ],
            out_specs=[
                pl.BlockSpec((n_r, d), lambda c, r: (0, 0)),     # resident acc
                pl.BlockSpec((d, t_c), lambda c, r: (0, c)),     # col^T tiles
            ],
        ),
        out_shape=[
            jax.ShapeDtypeStruct((n_r, d), jnp.float32),
            jax.ShapeDtypeStruct((d, n_c), jnp.float32),
        ],
        compiler_params=pltpu.CompilerParams(
            # Both outputs accumulate across the whole grid, so neither axis
            # may be split across TensorCores.
            dimension_semantics=("arbitrary", "arbitrary"),
            vmem_limit_bytes=vmem_limit_bytes),
    )(mat, col_b, row_t)
    return row_out, col_out_t.T


# ----------------------------------------------------------------------------
# Fallback tiled matmul (directed graphs / resident accumulator doesn't fit)
# ----------------------------------------------------------------------------
def _matmul_kernel(a_ref, x_ref, o_ref):
    """o[i] = sum_k A[i,k] @ x[k]; accumulates directly into the f32 out ref."""
    @pl.when(pl.program_id(1) == 0)
    def _():
        o_ref[...] = jnp.zeros_like(o_ref)
    o_ref[...] += jnp.dot(a_ref[...], x_ref[...],
                          preferred_element_type=jnp.float32)


def _matmul_pass(a, x, t_m, t_k, vmem_limit_bytes):
    """out = A @ x with bf16 operands and f32 accumulation."""
    m, k_dim = a.shape
    d = x.shape[1]
    x_b = x.astype(jnp.bfloat16)
    return pl.pallas_call(
        _matmul_kernel,
        grid_spec=pltpu.PrefetchScalarGridSpec(
            num_scalar_prefetch=0,
            grid=(m // t_m, k_dim // t_k),
            in_specs=[pl.BlockSpec((t_m, t_k), lambda i, k: (i, k)),
                      pl.BlockSpec((t_k, d), lambda i, k: (k, 0))],
            out_specs=pl.BlockSpec((t_m, d), lambda i, k: (i, 0)),
        ),
        out_shape=jax.ShapeDtypeStruct((m, d), jnp.float32),
        compiler_params=pltpu.CompilerParams(
            dimension_semantics=("parallel", "arbitrary"),
            vmem_limit_bytes=vmem_limit_bytes),
    )(a, x_b)


# ----------------------------------------------------------------------------
# Graph preprocessing (JAX glue — builds the dense normalized adjacency)
# ----------------------------------------------------------------------------
def _directed_adjacency(edge_index, n_src_p, n_dst_p):
    """A[dst, src] = 1/sqrt(deg_src * deg_dst)  (bf16); zero-degree -> 0."""
    src, dst = edge_index
    ones = jnp.ones(src.shape, jnp.float32)
    deg_src = jnp.zeros((n_src_p,), jnp.float32).at[src].add(ones)
    deg_dst = jnp.zeros((n_dst_p,), jnp.float32).at[dst].add(ones)
    inv_s = jnp.where(deg_src > 0, lax.rsqrt(jnp.maximum(deg_src, 1e-12)), 0.0)
    inv_d = jnp.where(deg_dst > 0, lax.rsqrt(jnp.maximum(deg_dst, 1e-12)), 0.0)
    w = inv_s[src] * inv_d[dst]
    return (jnp.zeros((n_dst_p, n_src_p), jnp.float32)
            .at[dst, src].add(w)).astype(jnp.bfloat16)


def build_adjacency(usr_edge_index, itm_edge_index, n_u_p, n_i_p, undirected):
    """Dense normalized adjacency.  Returns (a_iu, a_ui).

    a_iu [n_u_p, n_i_p]: item -> user propagation (users updated from items).
    a_ui [n_i_p, n_u_p]: user -> item propagation; None means "a_iu^T".

    For static graphs build this ONCE and pass it via
    light_gcn_embedding_forward(..., adjacency=(a_iu, a_ui)); the dense scatter
    build is O(N_u * N_i) HBM and should not be redone every step.
    """
    # TODO(synk): exact semantics of utils.make_undirected / utils.make_weight
    # are not given; standard LightGCN is assumed (dedup'd undirected edge set,
    # symmetric 1/sqrt(deg_u*deg_i) weights, zero-degree -> 0), under which
    # a_ui == a_iu^T and only one matrix is needed.
    if undirected:
        u = jnp.concatenate([usr_edge_index[0], itm_edge_index[1]])
        i = jnp.concatenate([usr_edge_index[1], itm_edge_index[0]])
        ones = jnp.ones(u.shape, jnp.float32)
        adj = jnp.zeros((n_u_p, n_i_p), jnp.float32).at[u, i].max(ones)
        deg_u = adj.sum(axis=1)
        deg_i = adj.sum(axis=0)
        inv_u = jnp.where(deg_u > 0, lax.rsqrt(jnp.maximum(deg_u, 1e-12)), 0.0)
        inv_i = jnp.where(deg_i > 0, lax.rsqrt(jnp.maximum(deg_i, 1e-12)), 0.0)
        a_iu = (adj * inv_u[:, None] * inv_i[None, :]).astype(jnp.bfloat16)
        return a_iu, None
    a_ui = _directed_adjacency(usr_edge_index, n_src_p=n_u_p, n_dst_p=n_i_p)
    a_iu = _directed_adjacency(itm_edge_index, n_src_p=n_i_p, n_dst_p=n_u_p)
    return a_iu, a_ui


# ----------------------------------------------------------------------------
# LGCEmbedding forward
# ----------------------------------------------------------------------------
def light_gcn_embedding_forward(params, usr_n_id, itm_n_id,
                                usr_edge_index, itm_edge_index,
                                weights, undirected=True, adjacency=None):
    """LGCEmbedding.forward: embedding lookup + K-hop LightGCN propagation.

    Returns (new_usr_x [N_u, D], new_itm_x [N_i, D]) like the PyTorch module.
    """
    # LGCProp.__init__ weight handling
    if isinstance(weights, int):
        weights = [1.0 / (weights + 1)] * (weights + 1)
    weights = [float(w) for w in weights]

    # NodeEmbedding lookup (glue; not the hot path).
    usr_x = params["user"][usr_n_id].astype(jnp.float32)
    itm_x = params["item"][itm_n_id].astype(jnp.float32)
    n_u, d = usr_x.shape
    n_i = itm_x.shape[0]

    # Padding is decoupled from the tile choice: node counts go to a multiple
    # of 256 (so 128-multiple divisors always exist), D to a multiple of 128.
    n_u_p = _round_up(max(n_u, _NODE_PAD), _NODE_PAD)
    n_i_p = _round_up(max(n_i, _NODE_PAD), _NODE_PAD)
    d_p = _round_up(d, _LANE)

    usr_xp = _pad_2d(usr_x, n_u_p, d_p)
    itm_xp = _pad_2d(itm_x, n_i_p, d_p)

    if adjacency is None:
        adjacency = build_adjacency(usr_edge_index, itm_edge_index,
                                    n_u_p, n_i_p, undirected)
    a_iu, a_ui = adjacency

    new_usr = weights[0] * usr_xp
    new_itm = weights[0] * itm_xp

    if a_ui is None:
        # Undirected: a_ui == a_iu^T.  Use the fused single-pass-over-A hop.
        plan = _plan_fused(n_u_p, n_i_p, d_p)
        mat, rows_are_users = a_iu, True
        if plan is None:
            # Try the other orientation (items as the VMEM-resident side).
            plan = _plan_fused(n_i_p, n_u_p, d_p)
            if plan is not None:
                mat, rows_are_users = a_iu.T, False   # materialized once only
        if plan is not None:
            t_r, t_c, vmem = plan
            for w in weights[1:]:
                if rows_are_users:
                    usr_xp, itm_xp = _fused_hop(mat, usr_xp, itm_xp,
                                                t_r, t_c, vmem)
                else:
                    itm_xp, usr_xp = _fused_hop(mat, itm_xp, usr_xp,
                                                t_r, t_c, vmem)
                new_usr = new_usr + w * usr_xp
                new_itm = new_itm + w * itm_xp
            return new_usr[:n_u, :d], new_itm[:n_i, :d]
        # Resident accumulator does not fit: materialize A^T once so neither
        # fallback pass needs a transposed-LHS matmul.
        a_ui = a_iu.T

    # Directed graphs / large-graph fallback: one tiled pass per side per hop.
    plan_u = _plan_matmul(n_u_p, n_i_p, d_p)
    plan_i = _plan_matmul(n_i_p, n_u_p, d_p)
    for w in weights[1:]:
        tmp_usr = _matmul_pass(a_iu, itm_xp, *plan_u)
        tmp_itm = _matmul_pass(a_ui, usr_xp, *plan_i)
        usr_xp, itm_xp = tmp_usr, tmp_itm
        new_usr = new_usr + w * usr_xp
        new_itm = new_itm + w * itm_xp
    return new_usr[:n_u, :d], new_itm[:n_i, :d]


# ----------------------------------------------------------------------------
# Demo
# ----------------------------------------------------------------------------
if __name__ == "__main__":
    key = jax.random.PRNGKey(0)
    k1, k2, k3, k4 = jax.random.split(key, 4)

    num_embeddings = {"user": 32, "item": 48}
    embedding_dim = 32
    weights = 2  # -> [1/3, 1/3, 1/3], i.e. 2 propagation hops

    params = {
        "user": 0.1 * jax.random.normal(
            k1, (num_embeddings["user"], embedding_dim), jnp.float32),
        "item": 0.1 * jax.random.normal(
            k2, (num_embeddings["item"], embedding_dim), jnp.float32),
    }

    n_u, n_i = 16, 24
    usr_n_id = jnp.arange(n_u, dtype=jnp.int32)
    itm_n_id = jnp.arange(n_i, dtype=jnp.int32)

    e_edges = 40
    usr_edge_index = jnp.stack([
        jax.random.randint(k3, (e_edges,), 0, n_u),
        jax.random.randint(k4, (e_edges,), 0, n_i),
    ]).astype(jnp.int32)                       # [2, E]: user src -> item dst
    itm_edge_index = usr_edge_index[::-1]      # [2, E]: item src -> user dst

    usr_out, itm_out = light_gcn_embedding_forward(
        params,
        usr_n_id=usr_n_id,
        itm_n_id=itm_n_id,
        usr_edge_index=usr_edge_index,
        itm_edge_index=itm_edge_index,
        weights=weights,
        undirected=True,
    )
    jax.block_until_ready((usr_out, itm_out))

    assert usr_out.shape == (n_u, embedding_dim)
    assert itm_out.shape == (n_i, embedding_dim)
    assert bool(jnp.all(jnp.isfinite(usr_out)))
    assert bool(jnp.all(jnp.isfinite(itm_out)))

    # Pure-JAX reference (same bf16 adjacency values, f32 math throughout).
    a_full, _ = build_adjacency(usr_edge_index, itm_edge_index,
                                n_u, n_i, undirected=True)
    a_full = a_full.astype(jnp.float32)
    u_ref = params["user"][usr_n_id].astype(jnp.float32)
    i_ref = params["item"][itm_n_id].astype(jnp.float32)
    w_list = [1.0 / 3.0] * 3
    nu_ref = w_list[0] * u_ref
    ni_ref = w_list[0] * i_ref
    for w in w_list[1:]:
        u_ref, i_ref = a_full @ i_ref, a_full.T @ u_ref
        nu_ref = nu_ref + w * u_ref
        ni_ref = ni_ref + w * i_ref
    assert bool(jnp.allclose(usr_out, nu_ref, rtol=3e-2, atol=3e-3)), "user mismatch"
    assert bool(jnp.allclose(itm_out, ni_ref, rtol=3e-2, atol=3e-3)), "item mismatch"

    print("KERNEL_OK")
</pallas_src>

<mosaic_0001>
module attributes {stable_mosaic.version = 11 : i64} {
  func.func @_fused_hop_kernel(%arg0: i32, %arg1: i32, %arg2: memref<256x256xbf16, #tpu.memory_space<vmem>>, %arg3: memref<256x128xbf16, #tpu.memory_space<vmem>>, %arg4: memref<128x256xbf16, #tpu.memory_space<vmem>>, %arg5: memref<256x128xf32, #tpu.memory_space<vmem>>, %arg6: memref<128x256xf32, #tpu.memory_space<vmem>>) attributes {dimension_semantics = [#tpu.dimension_semantics<arbitrary>, #tpu.dimension_semantics<arbitrary>], iteration_bounds = array<i64: 1, 1>, scalar_prefetch = 0 : i64, scratch_operands = 0 : i64, tpu.core_type = #tpu.core_type<tc>, window_params = [{transform_indices = @transform_0, window_bounds = array<i64: 256, 256>}, {transform_indices = @transform_1, window_bounds = array<i64: 256, 128>}, {transform_indices = @transform_2, window_bounds = array<i64: 128, 256>}, {pipeline_mode = #tpu.pipeline_mode<synchronous>, transform_indices = @transform_3, window_bounds = array<i64: 256, 128>}, {transform_indices = @transform_4, window_bounds = array<i64: 128, 256>}]} {
    %c0_i32 = arith.constant 0 : i32
    %0 = arith.cmpi eq, %arg0, %c0_i32 : i32
    %c0_i32_0 = arith.constant 0 : i32
    %1 = arith.cmpi eq, %arg1, %c0_i32_0 : i32
    %2 = arith.andi %0, %1 : i1
    %3 = arith.extui %2 : i1 to i32
    %c0_i32_1 = arith.constant 0 : i32
    %4 = arith.cmpi ne, %3, %c0_i32_1 : i32
    scf.if %4 {
      %cst_16 = arith.constant 0.000000e+00 : f32
      %23 = vector.broadcast %cst_16 : f32 to vector<256x128xf32>
      %c0_17 = arith.constant 0 : index
      %c0_18 = arith.constant 0 : index
      %24 = vector.load %arg5[%c0_17, %c0_18] : memref<256x128xf32, #tpu.memory_space<vmem>>, vector<256x128xf32>
      tpu.vector_store %arg5[%c0_17, %c0_18], %23 {strides = array<i32>} : memref<256x128xf32, #tpu.memory_space<vmem>>, vector<256x128xf32>,
    } else {
    }
    %c0_i32_2 = arith.constant 0 : i32
    %5 = arith.cmpi eq, %arg1, %c0_i32_2 : i32
    %6 = arith.extui %5 : i1 to i32
    %c0_i32_3 = arith.constant 0 : i32
    %7 = arith.cmpi ne, %6, %c0_i32_3 : i32
    scf.if %7 {
      %cst_16 = arith.constant 0.000000e+00 : f32
      %23 = vector.broadcast %cst_16 : f32 to vector<128x256xf32>
      %c0_17 = arith.constant 0 : index
      %c0_18 = arith.constant 0 : index
      %24 = vector.load %arg6[%c0_17, %c0_18] : memref<128x256xf32, #tpu.memory_space<vmem>>, vector<128x256xf32>
      tpu.vector_store %arg6[%c0_17, %c0_18], %23 {strides = array<i32>} : memref<128x256xf32, #tpu.memory_space<vmem>>, vector<128x256xf32>,
    } else {
    }
    %c0 = arith.constant 0 : index
    %c0_4 = arith.constant 0 : index
    %8 = vector.load %arg2[%c0, %c0_4] : memref<256x256xbf16, #tpu.memory_space<vmem>>, vector<256x256xbf16>
    %c0_5 = arith.constant 0 : index
    %c0_6 = arith.constant 0 : index
    %9 = vector.load %arg6[%c0_5, %c0_6] : memref<128x256xf32, #tpu.memory_space<vmem>>, vector<128x256xf32>
    %c0_7 = arith.constant 0 : index
    %c0_8 = arith.constant 0 : index
    %10 = vector.load %arg4[%c0_7, %c0_8] : memref<128x256xbf16, #tpu.memory_space<vmem>>, vector<128x256xbf16>
    %cst = arith.constant dense<0.000000e+00> : vector<128x256xf32>
    %11 = tpu.matmul %10, %8, %cst {dimension_numbers = #tpu.dot_dimension_numbers<[1], [0], [0], [1], [0, 0, 1, 1], [], []>} : vector<128x256xbf16>, vector<256x256xbf16>, vector<128x256xf32> -> vector<128x256xf32>
    %12 = arith.addf %9, %11 : vector<128x256xf32>
    %c0_9 = arith.constant 0 : index
    %c0_10 = arith.constant 0 : index
    %13 = vector.load %arg6[%c0_9, %c0_10] : memref<128x256xf32, #tpu.memory_space<vmem>>, vector<128x256xf32>
    tpu.vector_store %arg6[%c0_9, %c0_10], %12 {strides = array<i32>} : memref<128x256xf32, #tpu.memory_space<vmem>>, vector<128x256xf32>,
    %c256_i32 = arith.constant 256 : i32
    %14 = arith.muli %arg1, %c256_i32 : i32
    %15 = tpu.assume_multiple %14, 256 : i32
    %16 = arith.index_cast %15 : i32 to index
    %c0_11 = arith.constant 0 : index
    %17 = vector.load %arg5[%16, %c0_11] : memref<256x128xf32, #tpu.memory_space<vmem>>, vector<256x128xf32>
    %c0_12 = arith.constant 0 : index
    %c0_13 = arith.constant 0 : index
    %18 = vector.load %arg3[%c0_12, %c0_13] : memref<256x128xbf16, #tpu.memory_space<vmem>>, vector<256x128xbf16>
    %cst_14 = arith.constant dense<0.000000e+00> : vector<256x128xf32>
    %19 = tpu.matmul %8, %18, %cst_14 {dimension_numbers = #tpu.dot_dimension_numbers<[1], [0], [0], [1], [0, 0, 1, 1], [], []>} : vector<256x256xbf16>, vector<256x128xbf16>, vector<256x128xf32> -> vector<256x128xf32>
    %20 = arith.addf %17, %19 : vector<256x128xf32>
    %21 = arith.index_cast %15 : i32 to index
    %c0_15 = arith.constant 0 : index
    %22 = vector.load %arg5[%21, %c0_15] : memref<256x128xf32, #tpu.memory_space<vmem>>, vector<256x128xf32>
    tpu.vector_store %arg5[%21, %c0_15], %20 {strides = array<i32>} : memref<256x128xf32, #tpu.memory_space<vmem>>, vector<256x128xf32>,
    return
  }
  func.func @transform_0(%arg0: i32, %arg1: i32) -> (i32, i32) {
    %c0_i32 = arith.constant 0 : i32
    return %arg1, %arg0 : i32, i32
  }
  func.func @transform_1(%arg0: i32, %arg1: i32) -> (i32, i32) {
    %c0_i32 = arith.constant 0 : i32
    %c0_i32_0 = arith.constant 0 : i32
    return %arg0, %c0_i32 : i32, i32
  }
  func.func @transform_2(%arg0: i32, %arg1: i32) -> (i32, i32) {
    %c0_i32 = arith.constant 0 : i32
    %c0_i32_0 = arith.constant 0 : i32
    return %c0_i32, %arg1 : i32, i32
  }
  func.func @transform_3(%arg0: i32, %arg1: i32) -> (i32, i32) {
    %c0_i32 = arith.constant 0 : i32
    %c0_i32_0 = arith.constant 0 : i32
    %c0_i32_1 = arith.constant 0 : i32
    return %c0_i32, %c0_i32_0 : i32, i32
  }
  func.func @transform_4(%arg0: i32, %arg1: i32) -> (i32, i32) {
    %c0_i32 = arith.constant 0 : i32
    %c0_i32_0 = arith.constant 0 : i32
    return %c0_i32, %arg0 : i32, i32
  }
}

</mosaic_0001>

<llo_original>
// kernel: tpu_custom_call.1
$region0: #{tpu_custom_call.1}
  #allocation0 [shape = 'u32[]', space=smem, size = 0x4, offset = 0x4, fixed_abs, tag = 'smem constant byte address 0x4 - core index']
  #allocation1 [shape = 'u32[144,128]{1,0:T(1,128)}', space=vmem, size = 0x12000, scoped, tag = 'internal scratch']
  %s0 = inlined_call_operand.hbm [shape: bf16[256,256], index: 0, kind: input, shape index: {}]
  %s1 = inlined_call_operand.hbm [shape: bf16[256,128], index: 1, kind: input, shape index: {}]
  %s2 = inlined_call_operand.hbm [shape: bf16[128,256], index: 2, kind: input, shape index: {}]
  %s3 = inlined_call_operand.hbm [shape: f32[256,128], index: 3, kind: output, shape index: {0}]
  %s4 = inlined_call_operand.hbm [shape: f32[128,256], index: 4, kind: output, shape index: {1}]
  %5 = xla_tuple %s3, %s4
  %s6 = sld [smem:[#allocation0]]
  $region50: #{tpu_custom_call.1} parent=0
    _
  %s8 = ssub.s32 1, %s6
  %s9 = scalar_select 0, %s8, %s6
  $region1: #{tpu_custom_call.1} parent=0
    #allocation2 [shape = 'u8[131072]{0}', space=vmem, size = 0x20000, scoped, tag = 'input window, operand 0, single buffered']
    #allocation3 [shape = 's32[1]{0}', space=sflag, size = 0x4, scoped, tag = 'scoped memory for tpu_custom_call.1']
    #allocation4 [shape = 's32[1]{0}', space=sflag, size = 0x4, scoped, tag = 'scoped memory for tpu_custom_call.1']
    #allocation5 [shape = 'u8[65536]{0}', space=vmem, size = 0x10000, scoped, tag = 'input window, operand 1, single buffered']
    #allocation6 [shape = 's32[1]{0}', space=sflag, size = 0x4, scoped, tag = 'scoped memory for tpu_custom_call.1']
    #allocation7 [shape = 'u8[65536]{0}', space=vmem, size = 0x10000, scoped, tag = 'input window, operand 2, single buffered']
    #allocation8 [shape = 'u8[131072]{0}', space=vmem, size = 0x20000, scoped, tag = 'output window, operand 0, single buffered']
    #allocation9 [shape = 'u8[131072]{0}', space=vmem, size = 0x20000, scoped, tag = 'output window, operand 1, single buffered']
    #allocation10 [shape = 's32[1]{0}', space=sflag, size = 0x4, scoped, tag = 'scoped memory for tpu_custom_call.1']
    %10 = vsyncpa [#allocation3], 0
    %11 = vsyncpa [#allocation6], 0
    %12 = vsyncpa [#allocation4], 0
    %13 = vsyncpa [#allocation10], 0
    // Predicated region
    $region2: #{tpu_custom_call.1} parent=1 // pred_check
      _
    $region3: #{tpu_custom_call.1} parent=1 // pred_check_branch
      %15 = sbr.rel (0) target = $region5
    $region4: #{tpu_custom_call.1} parent=1 // pred_region
      %s17 = ssub.s32 4096, 4096
      %18 = vsyncadd [#allocation3], %s17
      %s19 = sshll.u32 [#allocation2], 4
      %s20 = int_to_ptr.vmem [resolvable:$true] %s19
      %25 = dma.hbm_to_vmem [thread:$0]  %s0, 4096, %s20, [#allocation3], 128, 128, 8
    $region5: #{tpu_custom_call.1} parent=1 // pred_fallthru
      _
    // Predicated region
    $region6: #{tpu_custom_call.1} parent=1 // pred_check
      _
    $region7: #{tpu_custom_call.1} parent=1 // pred_check_branch
      %27 = sbr.rel (0) target = $region9
    $region8: #{tpu_custom_call.1} parent=1 // pred_region
      %s29 = ssub.s32 2048, 2048
      %30 = vsyncadd [#allocation6], %s29
      %s31 = sshll.u32 [#allocation5], 4
      %s32 = int_to_ptr.vmem [resolvable:$true] %s31
      %37 = dma.hbm_to_vmem [thread:$0]  %s1, 2048, %s32, [#allocation6], 64, 64, 4
    $region9: #{tpu_custom_call.1} parent=1 // pred_fallthru
      _
    // Predicated region
    $region10: #{tpu_custom_call.1} parent=1 // pred_check
      _
    $region11: #{tpu_custom_call.1} parent=1 // pred_check_branch
      %39 = sbr.rel (0) target = $region13
    $region12: #{tpu_custom_call.1} parent=1 // pred_region
      %s41 = ssub.s32 2048, 2048
      %42 = vsyncadd [#allocation6], %s41
      %s43 = sshll.u32 [#allocation7], 4
      %s44 = int_to_ptr.vmem [resolvable:$true] %s43
      %49 = dma.hbm_to_vmem [thread:$0]  %s2, 2048, %s44, [#allocation6], 128, 128, 8
    $region13: #{tpu_custom_call.1} parent=1 // pred_fallthru
      _
    // Predicated region
    $region14: #{tpu_custom_call.1} parent=1 // pred_check
      _
    $region15: #{tpu_custom_call.1} parent=1 // pred_check_branch
      %51 = sbr.rel (0) target = $region17
    $region16: #{tpu_custom_call.1} parent=1 // pred_region
      %52 = dma.done [#allocation3], 4096
    $region17: #{tpu_custom_call.1} parent=1 // pred_fallthru
      _
    // Predicated region
    $region18: #{tpu_custom_call.1} parent=1 // pred_check
      _
    $region19: #{tpu_custom_call.1} parent=1 // pred_check_branch
      %54 = sbr.rel (0) target = $region21
    $region20: #{tpu_custom_call.1} parent=1 // pred_region
      %55 = dma.done [#allocation6], 2048
    $region21: #{tpu_custom_call.1} parent=1 // pred_fallthru
      _
    // Predicated region
    $region22: #{tpu_custom_call.1} parent=1 // pred_check
      _
    $region23: #{tpu_custom_call.1} parent=1 // pred_check_branch
      %57 = sbr.rel (0) target = $region25
    $region24: #{tpu_custom_call.1} parent=1 // pred_region
      %58 = dma.done [#allocation6], 2048
    $region25: #{tpu_custom_call.1} parent=1 // pred_fallthru
      _
    %p60 = scmp.eq.s32.totalorder 0, 0
    %p61 = scmp.eq.s32.totalorder 0, 0
    %p62 = pnand %p60, %p61
    %p63 = pneg %p62
    // Predicated region
    $region26: #{tpu_custom_call.1} parent=1 // pred_check
      _
    $region27: #{tpu_custom_call.1} parent=1 // pred_check_branch
      %65 = sbr.rel (%p62) target = $region29
    $region28: #{tpu_custom_call.1} parent=1 // pred_region
      %66 = vst [vmem:[#allocation8] sm:$0xff] 0.0
      %67 = vst [vmem:[#allocation8 + $0x8] sm:$0xff] 0.0
      %68 = vst [vmem:[#allocation8 + $0x10] sm:$0xff] 0.0
      %69 = vst [vmem:[#allocation8 + $0x18] sm:$0xff] 0.0
      %70 = vst [vmem:[#allocation8 + $0x20] sm:$0xff] 0.0
      %71 = vst [vmem:[#allocation8 + $0x28] sm:$0xff] 0.0
      %72 = vst [vmem:[#allocation8 + $0x30] sm:$0xff] 0.0
      %73 = vst [vmem:[#allocation8 + $0x38] sm:$0xff] 0.0
      %74 = vst [vmem:[#allocation8 + $0x40] sm:$0xff] 0.0
      %75 = vst [vmem:[#allocation8 + $0x48] sm:$0xff] 0.0
      %76 = vst [vmem:[#allocation8 + $0x50] sm:$0xff] 0.0
      %77 = vst [vmem:[#allocation8 + $0x58] sm:$0xff] 0.0
      %78 = vst [vmem:[#allocation8 + $0x60] sm:$0xff] 0.0
      %79 = vst [vmem:[#allocation8 + $0x68] sm:$0xff] 0.0
      %80 = vst [vmem:[#allocation8 + $0x70] sm:$0xff] 0.0
      %81 = vst [vmem:[#allocation8 + $0x78] sm:$0xff] 0.0
      %82 = vst [vmem:[#allocation8 + $0x80] sm:$0xff] 0.0
      %83 = vst [vmem:[#allocation8 + $0x88] sm:$0xff] 0.0
      %84 = vst [vmem:[#allocation8 + $0x90] sm:$0xff] 0.0
      %85 = vst [vmem:[#allocation8 + $0x98] sm:$0xff] 0.0
      %86 = vst [vmem:[#allocation8 + $0xa0] sm:$0xff] 0.0
      %87 = vst [vmem:[#allocation8 + $0xa8] sm:$0xff] 0.0
      %88 = vst [vmem:[#allocation8 + $0xb0] sm:$0xff] 0.0
      %89 = vst [vmem:[#allocation8 + $0xb8] sm:$0xff] 0.0
      %90 = vst [vmem:[#allocation8 + $0xc0] sm:$0xff] 0.0
      %91 = vst [vmem:[#allocation8 + $0xc8] sm:$0xff] 0.0
      %92 = vst [vmem:[#allocation8 + $0xd0] sm:$0xff] 0.0
      %93 = vst [vmem:[#allocation8 + $0xd8] sm:$0xff] 0.0
      %94 = vst [vmem:[#allocation8 + $0xe0] sm:$0xff] 0.0
      %95 = vst [vmem:[#allocation8 + $0xe8] sm:$0xff] 0.0
      %96 = vst [vmem:[#allocation8 + $0xf0] sm:$0xff] 0.0
      %97 = vst [vmem:[#allocation8 + $0xf8] sm:$0xff] 0.0
    $region29: #{tpu_custom_call.1} parent=1 // pred_fallthru
      _
    // Predicated region
    $region30: #{tpu_custom_call.1} parent=1 // pred_check
      %p98 = pneg %p61
    $region31: #{tpu_custom_call.1} parent=1 // pred_check_branch
      %100 = sbr.rel (%p98) target = $region33
    $region32: #{tpu_custom_call.1} parent=1 // pred_region
      %101 = vst [vmem:[#allocation9] sm:$0xff] 0.0
      %102 = vst [vmem:[#allocation9 + $0x8] sm:$0xff] 0.0
      %103 = vst [vmem:[#allocation9 + $0x10] sm:$0xff] 0.0
      %104 = vst [vmem:[#allocation9 + $0x18] sm:$0xff] 0.0
      %105 = vst [vmem:[#allocation9 + $0x20] sm:$0xff] 0.0
      %106 = vst [vmem:[#allocation9 + $0x28] sm:$0xff] 0.0
      %107 = vst [vmem:[#allocation9 + $0x30] sm:$0xff] 0.0
      %108 = vst [vmem:[#allocation9 + $0x38] sm:$0xff] 0.0
      %109 = vst [vmem:[#allocation9 + $0x40] sm:$0xff] 0.0
      %110 = vst [vmem:[#allocation9 + $0x48] sm:$0xff] 0.0
      %111 = vst [vmem:[#allocation9 + $0x50] sm:$0xff] 0.0
      %112 = vst [vmem:[#allocation9 + $0x58] sm:$0xff] 0.0
      %113 = vst [vmem:[#allocation9 + $0x60] sm:$0xff] 0.0
      %114 = vst [vmem:[#allocation9 + $0x68] sm:$0xff] 0.0
      %115 = vst [vmem:[#allocation9 + $0x70] sm:$0xff] 0.0
      %116 = vst [vmem:[#allocation9 + $0x78] sm:$0xff] 0.0
      %117 = vst [vmem:[#allocation9 + $0x80] sm:$0xff] 0.0
      %118 = vst [vmem:[#allocation9 + $0x88] sm:$0xff] 0.0
      %119 = vst [vmem:[#allocation9 + $0x90] sm:$0xff] 0.0
      %120 = vst [vmem:[#allocation9 + $0x98] sm:$0xff] 0.0
      %121 = vst [vmem:[#allocation9 + $0xa0] sm:$0xff] 0.0
      %122 = vst [vmem:[#allocation9 + $0xa8] sm:$0xff] 0.0
      %123 = vst [vmem:[#allocation9 + $0xb0] sm:$0xff] 0.0
      %124 = vst [vmem:[#allocation9 + $0xb8] sm:$0xff] 0.0
      %125 = vst [vmem:[#allocation9 + $0xc0] sm:$0xff] 0.0
      %126 = vst [vmem:[#allocation9 + $0xc8] sm:$0xff] 0.0
      %127 = vst [vmem:[#allocation9 + $0xd0] sm:$0xff] 0.0
      %128 = vst [vmem:[#allocation9 + $0xd8] sm:$0xff] 0.0
      %129 = vst [vmem:[#allocation9 + $0xe0] sm:$0xff] 0.0
      %130 = vst [vmem:[#allocation9 + $0xe8] sm:$0xff] 0.0
      %131 = vst [vmem:[#allocation9 + $0xf0] sm:$0xff] 0.0
      %132 = vst [vmem:[#allocation9 + $0xf8] sm:$0xff] 0.0
    $region33: #{tpu_custom_call.1} parent=1 // pred_fallthru
      _
    %v133 = vld [vmem:[#allocation2] sm:$0xff]
    %v134 = vld [vmem:[#allocation2 + $0x8] sm:$0xff]
    %v135 = vld [vmem:[#allocation2 + $0x10] sm:$0xff]
    %v136 = vld [vmem:[#allocation2 + $0x18] sm:$0xff]
    %v137 = vld [vmem:[#allocation2 + $0x20] sm:$0xff]
    %v138 = vld [vmem:[#allocation2 + $0x28] sm:$0xff]
    %v139 = vld [vmem:[#allocation2 + $0x30] sm:$0xff]
    %v140 = vld [vmem:[#allocation2 + $0x38] sm:$0xff]
    %v141 = vld [vmem:[#allocation2 + $0x40] sm:$0xff]
    %v142 = vld [vmem:[#allocation2 + $0x48] sm:$0xff]
    %v143 = vld [vmem:[#allocation2 + $0x50] sm:$0xff]
    %v144 = vld [vmem:[#allocation2 + $0x58] sm:$0xff]
    %v145 = vld [vmem:[#allocation2 + $0x60] sm:$0xff]
    %v146 = vld [vmem:[#allocation2 + $0x68] sm:$0xff]
    %v147 = vld [vmem:[#allocation2 + $0x70] sm:$0xff]
    %v148 = vld [vmem:[#allocation2 + $0x78] sm:$0xff]
    %v149 = vld [vmem:[#allocation2 + $0x80] sm:$0xff]
    %v150 = vld [vmem:[#allocation2 + $0x88] sm:$0xff]
    %v151 = vld [vmem:[#allocation2 + $0x90] sm:$0xff]
    %v152 = vld [vmem:[#allocation2 + $0x98] sm:$0xff]
    %v153 = vld [vmem:[#allocation2 + $0xa0] sm:$0xff]
    %v154 = vld [vmem:[#allocation2 + $0xa8] sm:$0xff]
    %v155 = vld [vmem:[#allocation2 + $0xb0] sm:$0xff]
    %v156 = vld [vmem:[#allocation2 + $0xb8] sm:$0xff]
    %v157 = vld [vmem:[#allocation2 + $0xc0] sm:$0xff]
    %v158 = vld [vmem:[#allocation2 + $0xc8] sm:$0xff]
    %v159 = vld [vmem:[#allocation2 + $0xd0] sm:$0xff]
    %v160 = vld [vmem:[#allocation2 + $0xd8] sm:$0xff]
    %v161 = vld [vmem:[#allocation2 + $0xe0] sm:$0xff]
    %v162 = vld [vmem:[#allocation2 + $0xe8] sm:$0xff]
    %v163 = vld [vmem:[#allocation2 + $0xf0] sm:$0xff]
    %v164 = vld [vmem:[#allocation2 + $0xf8] sm:$0xff]
    %v165 = vld [vmem:[#allocation9] sm:$0xff]
    %v166 = vld [vmem:[#allocation9 + $0x8] sm:$0xff]
    %v167 = vld [vmem:[#allocation9 + $0x10] sm:$0xff]
    %v168 = vld [vmem:[#allocation9 + $0x18] sm:$0xff]
    %v169 = vld [vmem:[#allocation9 + $0x20] sm:$0xff]
    %v170 = vld [vmem:[#allocation9 + $0x28] sm:$0xff]
    %v171 = vld [vmem:[#allocation9 + $0x30] sm:$0xff]
    %v172 = vld [vmem:[#allocation9 + $0x38] sm:$0xff]
    %v173 = vld [vmem:[#allocation9 + $0x40] sm:$0xff]
    %v174 = vld [vmem:[#allocation9 + $0x48] sm:$0xff]
    %v175 = vld [vmem:[#allocation9 + $0x50] sm:$0xff]
    %v176 = vld [vmem:[#allocation9 + $0x58] sm:$0xff]
    %v177 = vld [vmem:[#allocation9 + $0x60] sm:$0xff]
    %v178 = vld [vmem:[#allocation9 + $0x68] sm:$0xff]
    %v179 = vld [vmem:[#allocation9 + $0x70] sm:$0xff]
    %v180 = vld [vmem:[#allocation9 + $0x78] sm:$0xff]
    %v181 = vld [vmem:[#allocation9 + $0x80] sm:$0xff]
    %v182 = vld [vmem:[#allocation9 + $0x88] sm:$0xff]
    %v183 = vld [vmem:[#allocation9 + $0x90] sm:$0xff]
    %v184 = vld [vmem:[#allocation9 + $0x98] sm:$0xff]
    %v185 = vld [vmem:[#allocation9 + $0xa0] sm:$0xff]
    %v186 = vld [vmem:[#allocation9 + $0xa8] sm:$0xff]
    %v187 = vld [vmem:[#allocation9 + $0xb0] sm:$0xff]
    %v188 = vld [vmem:[#allocation9 + $0xb8] sm:$0xff]
    %v189 = vld [vmem:[#allocation9 + $0xc0] sm:$0xff]
    %v190 = vld [vmem:[#allocation9 + $0xc8] sm:$0xff]
    %v191 = vld [vmem:[#allocation9 + $0xd0] sm:$0xff]
    %v192 = vld [vmem:[#allocation9 + $0xd8] sm:$0xff]
    %v193 = vld [vmem:[#allocation9 + $0xe0] sm:$0xff]
    %v194 = vld [vmem:[#allocation9 + $0xe8] sm:$0xff]
    %v195 = vld [vmem:[#allocation9 + $0xf0] sm:$0xff]
    %v196 = vld [vmem:[#allocation9 + $0xf8] sm:$0xff]
    %v197 = vld [vmem:[#allocation7] sm:$0xff]
    %v198 = vld [vmem:[#allocation7 + $0x8] sm:$0xff]
    %v199 = vld [vmem:[#allocation7 + $0x10] sm:$0xff]
    %v200 = vld [vmem:[#allocation7 + $0x18] sm:$0xff]
    %v201 = vld [vmem:[#allocation7 + $0x20] sm:$0xff]
    %v202 = vld [vmem:[#allocation7 + $0x28] sm:$0xff]
    %v203 = vld [vmem:[#allocation7 + $0x30] sm:$0xff]
    %v204 = vld [vmem:[#allocation7 + $0x38] sm:$0xff]
    %v205 = vld [vmem:[#allocation7 + $0x40] sm:$0xff]
    %v206 = vld [vmem:[#allocation7 + $0x48] sm:$0xff]
    %v207 = vld [vmem:[#allocation7 + $0x50] sm:$0xff]
    %v208 = vld [vmem:[#allocation7 + $0x58] sm:$0xff]
    %v209 = vld [vmem:[#allocation7 + $0x60] sm:$0xff]
    %v210 = vld [vmem:[#allocation7 + $0x68] sm:$0xff]
    %v211 = vld [vmem:[#allocation7 + $0x70] sm:$0xff]
    %v212 = vld [vmem:[#allocation7 + $0x78] sm:$0xff]
    %v229 = vunpack.c.l.b16 %v197
    %v230 = vunpack.c.h.b16 %v197
    %v231 = vunpack.c.l.b16 %v198
    %v232 = vunpack.c.h.b16 %v198
    %v233 = vunpack.c.l.b16 %v199
    %v234 = vunpack.c.h.b16 %v199
    %v235 = vunpack.c.l.b16 %v200
    %v236 = vunpack.c.h.b16 %v200
    %v237 = vunpack.c.l.b16 %v201
    %v238 = vunpack.c.h.b16 %v201
    %v239 = vunpack.c.l.b16 %v202
    %v240 = vunpack.c.h.b16 %v202
    %v241 = vunpack.c.l.b16 %v203
    %v242 = vunpack.c.h.b16 %v203
    %v243 = vunpack.c.l.b16 %v204
    %v244 = vunpack.c.h.b16 %v204
    %v245 = vunpack.c.l.b16 %v205
    %v246 = vunpack.c.h.b16 %v205
    %v247 = vunpack.c.l.b16 %v206
    %v248 = vunpack.c.h.b16 %v206
    %v249 = vunpack.c.l.b16 %v207
    %v250 = vunpack.c.h.b16 %v207
    %v251 = vunpack.c.l.b16 %v208
    %v252 = vunpack.c.h.b16 %v208
    %v253 = vunpack.c.l.b16 %v209
    %v254 = vunpack.c.h.b16 %v209
    %v255 = vunpack.c.l.b16 %v210
    %v256 = vunpack.c.h.b16 %v210
    %v257 = vunpack.c.l.b16 %v211
    %v258 = vunpack.c.h.b16 %v211
    %v259 = vunpack.c.l.b16 %v212
    %v260 = vunpack.c.h.b16 %v212
    %v261 = vpack.c.b16 %v231, %v229
    %v262 = vpack.c.b16 %v232, %v230
    %v263 = vpack.c.b16 %v235, %v233
    %v264 = vpack.c.b16 %v236, %v234
    %v265 = vpack.c.b16 %v239, %v237
    %v266 = vpack.c.b16 %v240, %v238
    %v267 = vpack.c.b16 %v243, %v241
    %v268 = vpack.c.b16 %v244, %v242
    %v269 = vpack.c.b16 %v247, %v245
    %v270 = vpack.c.b16 %v248, %v246
    %v271 = vpack.c.b16 %v251, %v249
    %v272 = vpack.c.b16 %v252, %v250
    %v273 = vpack.c.b16 %v255, %v253
    %v274 = vpack.c.b16 %v256, %v254
    %v275 = vpack.c.b16 %v259, %v257
    %v276 = vpack.c.b16 %v260, %v258
    %v325 = vunpack.c.l.b16 %v133
    %v326 = vunpack.c.h.b16 %v133
    %v327 = vunpack.c.l.b16 %v134
    %v328 = vunpack.c.h.b16 %v134
    %v329 = vunpack.c.l.b16 %v135
    %v330 = vunpack.c.h.b16 %v135
    %v331 = vunpack.c.l.b16 %v136
    %v332 = vunpack.c.h.b16 %v136
    %v333 = vunpack.c.l.b16 %v137
    %v334 = vunpack.c.h.b16 %v137
    %v335 = vunpack.c.l.b16 %v138
    %v336 = vunpack.c.h.b16 %v138
    %v337 = vunpack.c.l.b16 %v139
    %v338 = vunpack.c.h.b16 %v139
    %v339 = vunpack.c.l.b16 %v140
    %v340 = vunpack.c.h.b16 %v140
    %v341 = vunpack.c.l.b16 %v141
    %v342 = vunpack.c.h.b16 %v141
    %v343 = vunpack.c.l.b16 %v142
    %v344 = vunpack.c.h.b16 %v142
    %v345 = vunpack.c.l.b16 %v143
    %v346 = vunpack.c.h.b16 %v143
    %v347 = vunpack.c.l.b16 %v144
    %v348 = vunpack.c.h.b16 %v144
    %v349 = vunpack.c.l.b16 %v145
    %v350 = vunpack.c.h.b16 %v145
    %v351 = vunpack.c.l.b16 %v146
    %v352 = vunpack.c.h.b16 %v146
    %v353 = vunpack.c.l.b16 %v147
    %v354 = vunpack.c.h.b16 %v147
    %v355 = vunpack.c.l.b16 %v148
    %v356 = vunpack.c.h.b16 %v148
    %v357 = vunpack.c.l.b16 %v149
    %v358 = vunpack.c.h.b16 %v149
    %v359 = vunpack.c.l.b16 %v150
    %v360 = vunpack.c.h.b16 %v150
    %v361 = vunpack.c.l.b16 %v151
    %v362 = vunpack.c.h.b16 %v151
    %v363 = vunpack.c.l.b16 %v152
    %v364 = vunpack.c.h.b16 %v152
    %v365 = vunpack.c.l.b16 %v153
    %v366 = vunpack.c.h.b16 %v153
    %v367 = vunpack.c.l.b16 %v154
    %v368 = vunpack.c.h.b16 %v154
    %v369 = vunpack.c.l.b16 %v155
    %v370 = vunpack.c.h.b16 %v155
    %v371 = vunpack.c.l.b16 %v156
    %v372 = vunpack.c.h.b16 %v156
    %v373 = vunpack.c.l.b16 %v157
    %v374 = vunpack.c.h.b16 %v157
    %v375 = vunpack.c.l.b16 %v158
    %v376 = vunpack.c.h.b16 %v158
    %v377 = vunpack.c.l.b16 %v159
    %v378 = vunpack.c.h.b16 %v159
    %v379 = vunpack.c.l.b16 %v160
    %v380 = vunpack.c.h.b16 %v160
    %v381 = vunpack.c.l.b16 %v161
    %v382 = vunpack.c.h.b16 %v161
    %v383 = vunpack.c.l.b16 %v162
    %v384 = vunpack.c.h.b16 %v162
    %v385 = vunpack.c.l.b16 %v163
    %v386 = vunpack.c.h.b16 %v163
    %v387 = vunpack.c.l.b16 %v164
    %v388 = vunpack.c.h.b16 %v164
    %v389 = vpack.c.b16 %v327, %v325
    %v390 = vpack.c.b16 %v328, %v326
    %v391 = vpack.c.b16 %v331, %v329
    %v392 = vpack.c.b16 %v332, %v330
    %v393 = vpack.c.b16 %v335, %v333
    %v394 = vpack.c.b16 %v336, %v334
    %v395 = vpack.c.b16 %v339, %v337
    %v396 = vpack.c.b16 %v340, %v338
    %v397 = vpack.c.b16 %v343, %v341
    %v398 = vpack.c.b16 %v344, %v342
    %v399 = vpack.c.b16 %v347, %v345
    %v400 = vpack.c.b16 %v348, %v346
    %v401 = vpack.c.b16 %v351, %v349
    %v402 = vpack.c.b16 %v352, %v350
    %v403 = vpack.c.b16 %v355, %v353
    %v404 = vpack.c.b16 %v356, %v354
    %v405 = vpack.c.b16 %v359, %v357
    %v406 = vpack.c.b16 %v360, %v358
    %v407 = vpack.c.b16 %v363, %v361
    %v408 = vpack.c.b16 %v364, %v362
    %v409 = vpack.c.b16 %v367, %v365
    %v410 = vpack.c.b16 %v368, %v366
    %v411 = vpack.c.b16 %v371, %v369
    %v412 = vpack.c.b16 %v372, %v370
    %v413 = vpack.c.b16 %v375, %v373
    %v414 = vpack.c.b16 %v376, %v374
    %v415 = vpack.c.b16 %v379, %v377
    %v416 = vpack.c.b16 %v380, %v378
    %v417 = vpack.c.b16 %v383, %v381
    %v418 = vpack.c.b16 %v384, %v382
    %v419 = vpack.c.b16 %v387, %v385
    %v420 = vpack.c.b16 %v388, %v386
    %453 = vmatprep.subr.bf16.mxu0 %v390
    %454 = vmatpush1.bf16.msra.mxu0 %v389
    %455 = vmatprep.subr.bf16.mxu0 %v392
    %456 = vmatpush1.bf16.msra.mxu0 %v391
    %457 = vmatprep.subr.bf16.mxu0 %v394
    %458 = vmatpush1.bf16.msra.mxu0 %v393
    %459 = vmatprep.subr.bf16.mxu0 %v396
    %460 = vmatpush1.bf16.msra.mxu0 %v395
    %461 = vmatprep.subr.bf16.mxu0 %v398
    %462 = vmatpush1.bf16.msra.mxu0 %v397
    %463 = vmatprep.subr.bf16.mxu0 %v400
    %464 = vmatpush1.bf16.msra.mxu0 %v399
    %465 = vmatprep.subr.bf16.mxu0 %v402
    %466 = vmatpush1.bf16.msra.mxu0 %v401
    %467 = vmatprep.subr.bf16.mxu0 %v404
    %468 = vmatpush1.bf16.msra.mxu0 %v403
    %469 = vmatprep.subr.bf16.mxu0 %v406
    %470 = vmatpush1.bf16.msra.mxu0 %v405
    %471 = vmatprep.subr.bf16.mxu0 %v408
    %472 = vmatpush1.bf16.msra.mxu0 %v407
    %473 = vmatprep.subr.bf16.mxu0 %v410
    %474 = vmatpush1.bf16.msra.mxu0 %v409
    %475 = vmatprep.subr.bf16.mxu0 %v412
    %476 = vmatpush1.bf16.msra.mxu0 %v411
    %477 = vmatprep.subr.bf16.mxu0 %v414
    %478 = vmatpush1.bf16.msra.mxu0 %v413
    %479 = vmatprep.subr.bf16.mxu0 %v416
    %480 = vmatpush1.bf16.msra.mxu0 %v415
    %481 = vmatprep.subr.bf16.mxu0 %v418
    %482 = vmatpush1.bf16.msra.mxu0 %v417
    %483 = vmatprep.subr.bf16.mxu0 %v420
    %484 = vmatpush1.bf16.msra.mxu0 %v419
    %485 = vmatprep.mubr.bf16.mxu0 %v262
    %486 = vmatmul.mubr.bf16.gmra.mrb[0].mxu0 %v261
    %v487 = vpop.f32.mrb[0].mxu0
    %v488 = vadd.f32 0.0, %v487
    %v489 = vpop.f32.mrb[0].mxu0
    %v490 = vadd.f32 0.0, %v489
    %v491 = vpop.f32.mrb[0].mxu0
    %v492 = vadd.f32 0.0, %v491
    %v493 = vpop.f32.mrb[0].mxu0
    %v494 = vadd.f32 0.0, %v493
    %495 = vmatprep.mubr.bf16.mxu0 %v264
    %496 = vmatmul.mubr.bf16.gmra.mrb[0].mxu0 %v263
    %v497 = vpop.f32.mrb[0].mxu0
    %v498 = vadd.f32 0.0, %v497
    %v499 = vpop.f32.mrb[0].mxu0
    %v500 = vadd.f32 0.0, %v499
    %v501 = vpop.f32.mrb[0].mxu0
    %v502 = vadd.f32 0.0, %v501
    %v503 = vpop.f32.mrb[0].mxu0
    %v504 = vadd.f32 0.0, %v503
    %505 = vmatprep.mubr.bf16.mxu0 %v266
    %506 = vmatmul.mubr.bf16.gmra.mrb[0].mxu0 %v265
    %v507 = vpop.f32.mrb[0].mxu0
    %v508 = vadd.f32 0.0, %v507
    %v509 = vpop.f32.mrb[0].mxu0
    %v510 = vadd.f32 0.0, %v509
    %v511 = vpop.f32.mrb[0].mxu0
    %v512 = vadd.f32 0.0, %v511
    %v513 = vpop.f32.mrb[0].mxu0
    %v514 = vadd.f32 0.0, %v513
    %515 = vmatprep.mubr.bf16.mxu0 %v268
    %516 = vmatmul.mubr.bf16.gmra.mrb[0].mxu0 %v267
    %v517 = vpop.f32.mrb[0].mxu0
    %v518 = vadd.f32 0.0, %v517
    %v519 = vpop.f32.mrb[0].mxu0
    %v520 = vadd.f32 0.0, %v519
    %v521 = vpop.f32.mrb[0].mxu0
    %v522 = vadd.f32 0.0, %v521
    %v523 = vpop.f32.mrb[0].mxu0
    %v524 = vadd.f32 0.0, %v523
    %525 = vmatprep.mubr.bf16.mxu0 %v270
    %526 = vmatmul.mubr.bf16.gmra.mrb[0].mxu0 %v269
    %v527 = vpop.f32.mrb[0].mxu0
    %v528 = vadd.f32 0.0, %v527
    %v529 = vpop.f32.mrb[0].mxu0
    %v530 = vadd.f32 0.0, %v529
    %v531 = vpop.f32.mrb[0].mxu0
    %v532 = vadd.f32 0.0, %v531
    %v533 = vpop.f32.mrb[0].mxu0
    %v534 = vadd.f32 0.0, %v533
    %535 = vmatprep.mubr.bf16.mxu0 %v272
    %536 = vmatmul.mubr.bf16.gmra.mrb[0].mxu0 %v271
    %v537 = vpop.f32.mrb[0].mxu0
    %v538 = vadd.f32 0.0, %v537
    %v539 = vpop.f32.mrb[0].mxu0
    %v540 = vadd.f32 0.0, %v539
    %v541 = vpop.f32.mrb[0].mxu0
    %v542 = vadd.f32 0.0, %v541
    %v543 = vpop.f32.mrb[0].mxu0
    %v544 = vadd.f32 0.0, %v543
    %545 = vmatprep.mubr.bf16.mxu0 %v274
    %546 = vmatmul.mubr.bf16.gmra.mrb[0].mxu0 %v273
    %v547 = vpop.f32.mrb[0].mxu0
    %v548 = vadd.f32 0.0, %v547
    %v549 = vpop.f32.mrb[0].mxu0
    %v550 = vadd.f32 0.0, %v549
    %v551 = vpop.f32.mrb[0].mxu0
    %v552 = vadd.f32 0.0, %v551
    %v553 = vpop.f32.mrb[0].mxu0
    %v554 = vadd.f32 0.0, %v553
    %555 = vmatprep.mubr.bf16.mxu0 %v276
    %556 = vmatmul.mubr.bf16.gmra.mrb[0].mxu0 %v275
    %v557 = vpop.f32.mrb[0].mxu0
    %v558 = vadd.f32 0.0, %v557
    %v559 = vpop.f32.mrb[0].mxu0
    %v560 = vadd.f32 0.0, %v559
    %v561 = vpop.f32.mrb[0].mxu0
    %v562 = vadd.f32 0.0, %v561
    %v563 = vpop.f32.mrb[0].mxu0
    %v564 = vadd.f32 0.0, %v563
    %565 = vdwg.mxu0
    %v566 = vadd.f32 %v165, %v488
    %v567 = vadd.f32 %v166, %v490
    %v568 = vadd.f32 %v167, %v492
    %v569 = vadd.f32 %v168, %v494
    %v570 = vadd.f32 %v169, %v498
    %v571 = vadd.f32 %v170, %v500
    %v572 = vadd.f32 %v171, %v502
    %v573 = vadd.f32 %v172, %v504
    %v574 = vadd.f32 %v173, %v508
    %v575 = vadd.f32 %v174, %v510
    %v576 = vadd.f32 %v175, %v512
    %v577 = vadd.f32 %v176, %v514
    %v578 = vadd.f32 %v177, %v518
    %v579 = vadd.f32 %v178, %v520
    %v580 = vadd.f32 %v179, %v522
    %v581 = vadd.f32 %v180, %v524
    %v582 = vadd.f32 %v181, %v528
    %v583 = vadd.f32 %v182, %v530
    %v584 = vadd.f32 %v183, %v532
    %v585 = vadd.f32 %v184, %v534
    %v586 = vadd.f32 %v185, %v538
    %v587 = vadd.f32 %v186, %v540
    %v588 = vadd.f32 %v187, %v542
    %v589 = vadd.f32 %v188, %v544
    %v590 = vadd.f32 %v189, %v548
    %v591 = vadd.f32 %v190, %v550
    %v592 = vadd.f32 %v191, %v552
    %v593 = vadd.f32 %v192, %v554
    %v594 = vadd.f32 %v193, %v558
    %v595 = vadd.f32 %v194, %v560
    %v596 = vadd.f32 %v195, %v562
    %v597 = vadd.f32 %v196, %v564
    %598 = vst [vmem:[#allocation9] sm:$0xff] %v566
    %599 = vst [vmem:[#allocation9 + $0x8] sm:$0xff] %v567
    %600 = vst [vmem:[#allocation9 + $0x10] sm:$0xff] %v568
    %601 = vst [vmem:[#allocation9 + $0x18] sm:$0xff] %v569
    %602 = vst [vmem:[#allocation9 + $0x20] sm:$0xff] %v570
    %603 = vst [vmem:[#allocation9 + $0x28] sm:$0xff] %v571
    %604 = vst [vmem:[#allocation9 + $0x30] sm:$0xff] %v572
    %605 = vst [vmem:[#allocation9 + $0x38] sm:$0xff] %v573
    %606 = vst [vmem:[#allocation9 + $0x40] sm:$0xff] %v574
    %607 = vst [vmem:[#allocation9 + $0x48] sm:$0xff] %v575
    %608 = vst [vmem:[#allocation9 + $0x50] sm:$0xff] %v576
    %609 = vst [vmem:[#allocation9 + $0x58] sm:$0xff] %v577
    %610 = vst [vmem:[#allocation9 + $0x60] sm:$0xff] %v578
    %611 = vst [vmem:[#allocation9 + $0x68] sm:$0xff] %v579
    %612 = vst [vmem:[#allocation9 + $0x70] sm:$0xff] %v580
    %613 = vst [vmem:[#allocation9 + $0x78] sm:$0xff] %v581
    %614 = vst [vmem:[#allocation9 + $0x80] sm:$0xff] %v582
    %615 = vst [vmem:[#allocation9 + $0x88] sm:$0xff] %v583
    %616 = vst [vmem:[#allocation9 + $0x90] sm:$0xff] %v584
    %617 = vst [vmem:[#allocation9 + $0x98] sm:$0xff] %v585
    %618 = vst [vmem:[#allocation9 + $0xa0] sm:$0xff] %v586
    %619 = vst [vmem:[#allocation9 + $0xa8] sm:$0xff] %v587
    %620 = vst [vmem:[#allocation9 + $0xb0] sm:$0xff] %v588
    %621 = vst [vmem:[#allocation9 + $0xb8] sm:$0xff] %v589
    %622 = vst [vmem:[#allocation9 + $0xc0] sm:$0xff] %v590
    %623 = vst [vmem:[#allocation9 + $0xc8] sm:$0xff] %v591
    %624 = vst [vmem:[#allocation9 + $0xd0] sm:$0xff] %v592
    %625 = vst [vmem:[#allocation9 + $0xd8] sm:$0xff] %v593
    %626 = vst [vmem:[#allocation9 + $0xe0] sm:$0xff] %v594
    %627 = vst [vmem:[#allocation9 + $0xe8] sm:$0xff] %v595
    %628 = vst [vmem:[#allocation9 + $0xf0] sm:$0xff] %v596
    %629 = vst [vmem:[#allocation9 + $0xf8] sm:$0xff] %v597
    %s630 = smul.u32 0, 256
    %s631 = scalar_lea.vmem [#allocation8], %s630
    %v632 = vld [vmem:[%s631] sm:$0xff]
    %v633 = vld [vmem:[%s631 + $0x8] sm:$0xff]
    %v634 = vld [vmem:[%s631 + $0x10] sm:$0xff]
    %v635 = vld [vmem:[%s631 + $0x18] sm:$0xff]
    %v636 = vld [vmem:[%s631 + $0x20] sm:$0xff]
    %v637 = vld [vmem:[%s631 + $0x28] sm:$0xff]
    %v638 = vld [vmem:[%s631 + $0x30] sm:$0xff]
    %v639 = vld [vmem:[%s631 + $0x38] sm:$0xff]
    %v640 = vld [vmem:[%s631 + $0x40] sm:$0xff]
    %v641 = vld [vmem:[%s631 + $0x48] sm:$0xff]
    %v642 = vld [vmem:[%s631 + $0x50] sm:$0xff]
    %v643 = vld [vmem:[%s631 + $0x58] sm:$0xff]
    %v644 = vld [vmem:[%s631 + $0x60] sm:$0xff]
    %v645 = vld [vmem:[%s631 + $0x68] sm:$0xff]
    %v646 = vld [vmem:[%s631 + $0x70] sm:$0xff]
    %v647 = vld [vmem:[%s631 + $0x78] sm:$0xff]
    %v648 = vld [vmem:[%s631 + $0x80] sm:$0xff]
    %v649 = vld [vmem:[%s631 + $0x88] sm:$0xff]
    %v650 = vld [vmem:[%s631 + $0x90] sm:$0xff]
    %v651 = vld [vmem:[%s631 + $0x98] sm:$0xff]
    %v652 = vld [vmem:[%s631 + $0xa0] sm:$0xff]
    %v653 = vld [vmem:[%s631 + $0xa8] sm:$0xff]
    %v654 = vld [vmem:[%s631 + $0xb0] sm:$0xff]
    %v655 = vld [vmem:[%s631 + $0xb8] sm:$0xff]
    %v656 = vld [vmem:[%s631 + $0xc0] sm:$0xff]
    %v657 = vld [vmem:[%s631 + $0xc8] sm:$0xff]
    %v658 = vld [vmem:[%s631 + $0xd0] sm:$0xff]
    %v659 = vld [vmem:[%s631 + $0xd8] sm:$0xff]
    %v660 = vld [vmem:[%s631 + $0xe0] sm:$0xff]
    %v661 = vld [vmem:[%s631 + $0xe8] sm:$0xff]
    %v662 = vld [vmem:[%s631 + $0xf0] sm:$0xff]
    %v663 = vld [vmem:[%s631 + $0xf8] sm:$0xff]
    %v664 = vld [vmem:[#allocation5] sm:$0xf]
    %v665 = vld [vmem:[#allocation5 + $0x4] sm:$0xf]
    %v666 = vld [vmem:[#allocation5 + $0x8] sm:$0xf]
    %v667 = vld [vmem:[#allocation5 + $0xc] sm:$0xf]
    %v668 = vld [vmem:[#allocation5 + $0x10] sm:$0xf]
    %v669 = vld [vmem:[#allocation5 + $0x14] sm:$0xf]
    %v670 = vld [vmem:[#allocation5 + $0x18] sm:$0xf]
    %v671 = vld [vmem:[#allocation5 + $0x1c] sm:$0xf]
    %v672 = vld [vmem:[#allocation5 + $0x20] sm:$0xf]
    %v673 = vld [vmem:[#allocation5 + $0x24] sm:$0xf]
    %v674 = vld [vmem:[#allocation5 + $0x28] sm:$0xf]
    %v675 = vld [vmem:[#allocation5 + $0x2c] sm:$0xf]
    %v676 = vld [vmem:[#allocation5 + $0x30] sm:$0xf]
    %v677 = vld [vmem:[#allocation5 + $0x34] sm:$0xf]
    %v678 = vld [vmem:[#allocation5 + $0x38] sm:$0xf]
    %v679 = vld [vmem:[#allocation5 + $0x3c] sm:$0xf]
    %v680 = vld [vmem:[#allocation5 + $0x40] sm:$0xf]
    %v681 = vld [vmem:[#allocation5 + $0x44] sm:$0xf]
    %v682 = vld [vmem:[#allocation5 + $0x48] sm:$0xf]
    %v683 = vld [vmem:[#allocation5 + $0x4c] sm:$0xf]
    %v684 = vld [vmem:[#allocation5 + $0x50] sm:$0xf]
    %v685 = vld [vmem:[#allocation5 + $0x54] sm:$0xf]
    %v686 = vld [vmem:[#allocation5 + $0x58] sm:$0xf]
    %v687 = vld [vmem:[#allocation5 + $0x5c] sm:$0xf]
    %v688 = vld [vmem:[#allocation5 + $0x60] sm:$0xf]
    %v689 = vld [vmem:[#allocation5 + $0x64] sm:$0xf]
    %v690 = vld [vmem:[#allocation5 + $0x68] sm:$0xf]
    %v691 = vld [vmem:[#allocation5 + $0x6c] sm:$0xf]
    %v692 = vld [vmem:[#allocation5 + $0x70] sm:$0xf]
    %v693 = vld [vmem:[#allocation5 + $0x74] sm:$0xf]
    %v694 = vld [vmem:[#allocation5 + $0x78] sm:$0xf]
    %v695 = vld [vmem:[#allocation5 + $0x7c] sm:$0xf]
    %v728 = vunpack.c.l.b16 %v664
    %v729 = vunpack.c.l.b16 %v665
    %v730 = vunpack.c.l.b16 %v666
    %v731 = vunpack.c.l.b16 %v667
    %v732 = vunpack.c.l.b16 %v668
    %v733 = vunpack.c.l.b16 %v669
    %v734 = vunpack.c.l.b16 %v670
    %v735 = vunpack.c.l.b16 %v671
    %v736 = vunpack.c.l.b16 %v672
    %v737 = vunpack.c.l.b16 %v673
    %v738 = vunpack.c.l.b16 %v674
    %v739 = vunpack.c.l.b16 %v675
    %v740 = vunpack.c.l.b16 %v676
    %v741 = vunpack.c.l.b16 %v677
    %v742 = vunpack.c.l.b16 %v678
    %v743 = vunpack.c.l.b16 %v679
    %v744 = vunpack.c.l.b16 %v680
    %v745 = vunpack.c.l.b16 %v681
    %v746 = vunpack.c.l.b16 %v682
    %v747 = vunpack.c.l.b16 %v683
    %v748 = vunpack.c.l.b16 %v684
    %v749 = vunpack.c.l.b16 %v685
    %v750 = vunpack.c.l.b16 %v686
    %v751 = vunpack.c.l.b16 %v687
    %v752 = vunpack.c.l.b16 %v688
    %v753 = vunpack.c.l.b16 %v689
    %v754 = vunpack.c.l.b16 %v690
    %v755 = vunpack.c.l.b16 %v691
    %v756 = vunpack.c.l.b16 %v692
    %v757 = vunpack.c.l.b16 %v693
    %v758 = vunpack.c.l.b16 %v694
    %v759 = vunpack.c.l.b16 %v695
    %v760 = vpack.c.b16 %v729, %v728
    %v761 = vpack.c.b16 %v731, %v730
    %v762 = vpack.c.b16 %v733, %v732
    %v763 = vpack.c.b16 %v735, %v734
    %v764 = vpack.c.b16 %v737, %v736
    %v765 = vpack.c.b16 %v739, %v738
    %v766 = vpack.c.b16 %v741, %v740
    %v767 = vpack.c.b16 %v743, %v742
    %v768 = vpack.c.b16 %v745, %v744
    %v769 = vpack.c.b16 %v747, %v746
    %v770 = vpack.c.b16 %v749, %v748
    %v771 = vpack.c.b16 %v751, %v750
    %v772 = vpack.c.b16 %v753, %v752
    %v773 = vpack.c.b16 %v755, %v754
    %v774 = vpack.c.b16 %v757, %v756
    %v775 = vpack.c.b16 %v759, %v758
    %792 = vmatprep.subr.bf16.mxu0 0
    %793 = vmatpush1.bf16.msra.mxu0 %v760
    %794 = vmatprep.subr.bf16.mxu0 0
    %795 = vmatpush1.bf16.msra.mxu0 %v761
    %796 = vmatprep.subr.bf16.mxu0 0
    %797 = vmatpush1.bf16.msra.mxu0 %v762
    %798 = vmatprep.subr.bf16.mxu0 0
    %799 = vmatpush1.bf16.msra.mxu0 %v763
    %800 = vmatprep.subr.bf16.mxu0 0
    %801 = vmatpush1.bf16.msra.mxu0 %v764
    %802 = vmatprep.subr.bf16.mxu0 0
    %803 = vmatpush1.bf16.msra.mxu0 %v765
    %804 = vmatprep.subr.bf16.mxu0 0
    %805 = vmatpush1.bf16.msra.mxu0 %v766
    %806 = vmatprep.subr.bf16.mxu0 0
    %807 = vmatpush1.bf16.msra.mxu0 %v767
    %808 = vmatprep.subr.bf16.mxu0 0
    %809 = vmatpush1.bf16.msra.mxu0 %v768
    %810 = vmatprep.subr.bf16.mxu0 0
    %811 = vmatpush1.bf16.msra.mxu0 %v769
    %812 = vmatprep.subr.bf16.mxu0 0
    %813 = vmatpush1.bf16.msra.mxu0 %v770
    %814 = vmatprep.subr.bf16.mxu0 0
    %815 = vmatpush1.bf16.msra.mxu0 %v771
    %816 = vmatprep.subr.bf16.mxu0 0
    %817 = vmatpush1.bf16.msra.mxu0 %v772
    %818 = vmatprep.subr.bf16.mxu0 0
    %819 = vmatpush1.bf16.msra.mxu0 %v773
    %820 = vmatprep.subr.bf16.mxu0 0
    %821 = vmatpush1.bf16.msra.mxu0 %v774
    %822 = vmatprep.subr.bf16.mxu0 0
    %823 = vmatpush1.bf16.msra.mxu0 %v775
    %824 = vmatprep.mubr.bf16.mxu0 %v390
    %825 = vmatmul.mubr.bf16.gmra.mrb[0].mxu0 %v389
    %v826 = vpop.f32.mrb[0].mxu0
    %v827 = vadd.f32 0.0, %v826
    %v828 = vpop.f32.mrb[0].mxu0
    %v829 = vpop.f32.mrb[0].mxu0
    %v830 = vadd.f32 0.0, %v829
    %v831 = vpop.f32.mrb[0].mxu0
    %832 = vmatprep.mubr.bf16.mxu0 %v392
    %833 = vmatmul.mubr.bf16.gmra.mrb[0].mxu0 %v391
    %v834 = vpop.f32.mrb[0].mxu0
    %v835 = vadd.f32 0.0, %v834
    %v836 = vpop.f32.mrb[0].mxu0
    %v837 = vpop.f32.mrb[0].mxu0
    %v838 = vadd.f32 0.0, %v837
    %v839 = vpop.f32.mrb[0].mxu0
    %840 = vmatprep.mubr.bf16.mxu0 %v394
    %841 = vmatmul.mubr.bf16.gmra.mrb[0].mxu0 %v393
    %v842 = vpop.f32.mrb[0].mxu0
    %v843 = vadd.f32 0.0, %v842
    %v844 = vpop.f32.mrb[0].mxu0
    %v845 = vpop.f32.mrb[0].mxu0
    %v846 = vadd.f32 0.0, %v845
    %v847 = vpop.f32.mrb[0].mxu0
    %848 = vmatprep.mubr.bf16.mxu0 %v396
    %849 = vmatmul.mubr.bf16.gmra.mrb[0].mxu0 %v395
    %v850 = vpop.f32.mrb[0].mxu0
    %v851 = vadd.f32 0.0, %v850
    %v852 = vpop.f32.mrb[0].mxu0
    %v853 = vpop.f32.mrb[0].mxu0
    %v854 = vadd.f32 0.0, %v853
    %v855 = vpop.f32.mrb[0].mxu0
    %856 = vmatprep.mubr.bf16.mxu0 %v398
    %857 = vmatmul.mubr.bf16.gmra.mrb[0].mxu0 %v397
    %v858 = vpop.f32.mrb[0].mxu0
    %v859 = vadd.f32 0.0, %v858
    %v860 = vpop.f32.mrb[0].mxu0
    %v861 = vpop.f32.mrb[0].mxu0
    %v862 = vadd.f32 0.0, %v861
    %v863 = vpop.f32.mrb[0].mxu0
    %864 = vmatprep.mubr.bf16.mxu0 %v400
    %865 = vmatmul.mubr.bf16.gmra.mrb[0].mxu0 %v399
    %v866 = vpop.f32.mrb[0].mxu0
    %v867 = vadd.f32 0.0, %v866
    %v868 = vpop.f32.mrb[0].mxu0
    %v869 = vpop.f32.mrb[0].mxu0
    %v870 = vadd.f32 0.0, %v869
    %v871 = vpop.f32.mrb[0].mxu0
    %872 = vmatprep.mubr.bf16.mxu0 %v402
    %873 = vmatmul.mubr.bf16.gmra.mrb[0].mxu0 %v401
    %v874 = vpop.f32.mrb[0].mxu0
    %v875 = vadd.f32 0.0, %v874
    %v876 = vpop.f32.mrb[0].mxu0
    %v877 = vpop.f32.mrb[0].mxu0
    %v878 = vadd.f32 0.0, %v877
    %v879 = vpop.f32.mrb[0].mxu0
    %880 = vmatprep.mubr.bf16.mxu0 %v404
    %881 = vmatmul.mubr.bf16.gmra.mrb[0].mxu0 %v403
    %v882 = vpop.f32.mrb[0].mxu0
    %v883 = vadd.f32 0.0, %v882
    %v884 = vpop.f32.mrb[0].mxu0
    %v885 = vpop.f32.mrb[0].mxu0
    %v886 = vadd.f32 0.0, %v885
    %v887 = vpop.f32.mrb[0].mxu0
    %888 = vmatprep.mubr.bf16.mxu0 %v406
    %889 = vmatmul.mubr.bf16.gmra.mrb[0].mxu0 %v405
    %v890 = vpop.f32.mrb[0].mxu0
    %v891 = vadd.f32 0.0, %v890
    %v892 = vpop.f32.mrb[0].mxu0
    %v893 = vpop.f32.mrb[0].mxu0
    %v894 = vadd.f32 0.0, %v893
    %v895 = vpop.f32.mrb[0].mxu0
    %896 = vmatprep.mubr.bf16.mxu0 %v408
    %897 = vmatmul.mubr.bf16.gmra.mrb[0].mxu0 %v407
    %v898 = vpop.f32.mrb[0].mxu0
    %v899 = vadd.f32 0.0, %v898
    %v900 = vpop.f32.mrb[0].mxu0
    %v901 = vpop.f32.mrb[0].mxu0
    %v902 = vadd.f32 0.0, %v901
    %v903 = vpop.f32.mrb[0].mxu0
    %904 = vmatprep.mubr.bf16.mxu0 %v410
    %905 = vmatmul.mubr.bf16.gmra.mrb[0].mxu0 %v409
    %v906 = vpop.f32.mrb[0].mxu0
    %v907 = vadd.f32 0.0, %v906
    %v908 = vpop.f32.mrb[0].mxu0
    %v909 = vpop.f32.mrb[0].mxu0
    %v910 = vadd.f32 0.0, %v909
    %v911 = vpop.f32.mrb[0].mxu0
    %912 = vmatprep.mubr.bf16.mxu0 %v412
    %913 = vmatmul.mubr.bf16.gmra.mrb[0].mxu0 %v411
    %v914 = vpop.f32.mrb[0].mxu0
    %v915 = vadd.f32 0.0, %v914
    %v916 = vpop.f32.mrb[0].mxu0
    %v917 = vpop.f32.mrb[0].mxu0
    %v918 = vadd.f32 0.0, %v917
    %v919 = vpop.f32.mrb[0].mxu0
    %920 = vmatprep.mubr.bf16.mxu0 %v414
    %921 = vmatmul.mubr.bf16.gmra.mrb[0].mxu0 %v413
    %v922 = vpop.f32.mrb[0].mxu0
    %v923 = vadd.f32 0.0, %v922
    %v924 = vpop.f32.mrb[0].mxu0
    %v925 = vpop.f32.mrb[0].mxu0
    %v926 = vadd.f32 0.0, %v925
    %v927 = vpop.f32.mrb[0].mxu0
    %928 = vmatprep.mubr.bf16.mxu0 %v416
    %929 = vmatmul.mubr.bf16.gmra.mrb[0].mxu0 %v415
    %v930 = vpop.f32.mrb[0].mxu0
    %v931 = vadd.f32 0.0, %v930
    %v932 = vpop.f32.mrb[0].mxu0
    %v933 = vpop.f32.mrb[0].mxu0
    %v934 = vadd.f32 0.0, %v933
    %v935 = vpop.f32.mrb[0].mxu0
    %936 = vmatprep.mubr.bf16.mxu0 %v418
    %937 = vmatmul.mubr.bf16.gmra.mrb[0].mxu0 %v417
    %v938 = vpop.f32.mrb[0].mxu0
    %v939 = vadd.f32 0.0, %v938
    %v940 = vpop.f32.mrb[0].mxu0
    %v941 = vpop.f32.mrb[0].mxu0
    %v942 = vadd.f32 0.0, %v941
    %v943 = vpop.f32.mrb[0].mxu0
    %944 = vmatprep.mubr.bf16.mxu0 %v420
    %945 = vmatmul.mubr.bf16.gmra.mrb[0].mxu0 %v419
    %v946 = vpop.f32.mrb[0].mxu0
    %v947 = vadd.f32 0.0, %v946
    %v948 = vpop.f32.mrb[0].mxu0
    %v949 = vpop.f32.mrb[0].mxu0
    %v950 = vadd.f32 0.0, %v949
    %v951 = vpop.f32.mrb[0].mxu0
    %952 = vdwg.mxu0
    %v953 = vadd.f32 %v632, %v827
    %v954 = vadd.f32 %v633, %v830
    %v955 = vadd.f32 %v634, %v835
    %v956 = vadd.f32 %v635, %v838
    %v957 = vadd.f32 %v636, %v843
    %v958 = vadd.f32 %v637, %v846
    %v959 = vadd.f32 %v638, %v851
    %v960 = vadd.f32 %v639, %v854
    %v961 = vadd.f32 %v640, %v859
    %v962 = vadd.f32 %v641, %v862
    %v963 = vadd.f32 %v642, %v867
    %v964 = vadd.f32 %v643, %v870
    %v965 = vadd.f32 %v644, %v875
    %v966 = vadd.f32 %v645, %v878
    %v967 = vadd.f32 %v646, %v883
    %v968 = vadd.f32 %v647, %v886
    %v969 = vadd.f32 %v648, %v891
    %v970 = vadd.f32 %v649, %v894
    %v971 = vadd.f32 %v650, %v899
    %v972 = vadd.f32 %v651, %v902
    %v973 = vadd.f32 %v652, %v907
    %v974 = vadd.f32 %v653, %v910
    %v975 = vadd.f32 %v654, %v915
    %v976 = vadd.f32 %v655, %v918
    %v977 = vadd.f32 %v656, %v923
    %v978 = vadd.f32 %v657, %v926
    %v979 = vadd.f32 %v658, %v931
    %v980 = vadd.f32 %v659, %v934
    %v981 = vadd.f32 %v660, %v939
    %v982 = vadd.f32 %v661, %v942
    %v983 = vadd.f32 %v662, %v947
    %v984 = vadd.f32 %v663, %v950
    %985 = vst [vmem:[%s631] sm:$0xff] %v953
    %986 = vst [vmem:[%s631 + $0x8] sm:$0xff] %v954
    %987 = vst [vmem:[%s631 + $0x10] sm:$0xff] %v955
    %988 = vst [vmem:[%s631 + $0x18] sm:$0xff] %v956
    %989 = vst [vmem:[%s631 + $0x20] sm:$0xff] %v957
    %990 = vst [vmem:[%s631 + $0x28] sm:$0xff] %v958
    %991 = vst [vmem:[%s631 + $0x30] sm:$0xff] %v959
    %992 = vst [vmem:[%s631 + $0x38] sm:$0xff] %v960
    %993 = vst [vmem:[%s631 + $0x40] sm:$0xff] %v961
    %994 = vst [vmem:[%s631 + $0x48] sm:$0xff] %v962
    %995 = vst [vmem:[%s631 + $0x50] sm:$0xff] %v963
    %996 = vst [vmem:[%s631 + $0x58] sm:$0xff] %v964
    %997 = vst [vmem:[%s631 + $0x60] sm:$0xff] %v965
    %998 = vst [vmem:[%s631 + $0x68] sm:$0xff] %v966
    %999 = vst [vmem:[%s631 + $0x70] sm:$0xff] %v967
    %1000 = vst [vmem:[%s631 + $0x78] sm:$0xff] %v968
    %1001 = vst [vmem:[%s631 + $0x80] sm:$0xff] %v969
    %1002 = vst [vmem:[%s631 + $0x88] sm:$0xff] %v970
    %1003 = vst [vmem:[%s631 + $0x90] sm:$0xff] %v971
    %1004 = vst [vmem:[%s631 + $0x98] sm:$0xff] %v972
    %1005 = vst [vmem:[%s631 + $0xa0] sm:$0xff] %v973
    %1006 = vst [vmem:[%s631 + $0xa8] sm:$0xff] %v974
    %1007 = vst [vmem:[%s631 + $0xb0] sm:$0xff] %v975
    %1008 = vst [vmem:[%s631 + $0xb8] sm:$0xff] %v976
    %1009 = vst [vmem:[%s631 + $0xc0] sm:$0xff] %v977
    %1010 = vst [vmem:[%s631 + $0xc8] sm:$0xff] %v978
    %1011 = vst [vmem:[%s631 + $0xd0] sm:$0xff] %v979
    %1012 = vst [vmem:[%s631 + $0xd8] sm:$0xff] %v980
    %1013 = vst [vmem:[%s631 + $0xe0] sm:$0xff] %v981
    %1014 = vst [vmem:[%s631 + $0xe8] sm:$0xff] %v982
    %1015 = vst [vmem:[%s631 + $0xf0] sm:$0xff] %v983
    %1016 = vst [vmem:[%s631 + $0xf8] sm:$0xff] %v984
    // Predicated region
    $region34: #{tpu_custom_call.1} parent=1 // pred_check
      _
    $region35: #{tpu_custom_call.1} parent=1 // pred_check_branch
      %1018 = sbr.rel (0) target = $region37
    $region36: #{tpu_custom_call.1} parent=1 // pred_region
      %s1020 = ssub.s32 4096, 4096
      %1021 = vsyncadd [#allocation4], %s1020
      %s1022 = sshll.u32 [#allocation8], 4
      %s1023 = int_to_ptr.vmem [resolvable:$true] %s1022
      %1028 = dma.vmem_to_hbm [thread:$0]  %s1023, 4096, %s3, [#allocation4], 128, 128, 8
    $region37: #{tpu_custom_call.1} parent=1 // pred_fallthru
      _
    // Predicated region
    $region38: #{tpu_custom_call.1} parent=1 // pred_check
      _
    $region39: #{tpu_custom_call.1} parent=1 // pred_check_branch
      %1030 = sbr.rel (0) target = $region41
    $region40: #{tpu_custom_call.1} parent=1 // pred_region
      %s1032 = ssub.s32 4096, 4096
      %1033 = vsyncadd [#allocation10], %s1032
      %s1034 = sshll.u32 [#allocation9], 4
      %s1035 = int_to_ptr.vmem [resolvable:$true] %s1034
      %1040 = dma.vmem_to_hbm [thread:$0]  %s1035, 4096, %s4, [#allocation10], 256, 256, 16
    $region41: #{tpu_custom_call.1} parent=1 // pred_fallthru
      _
    // Predicated region
    $region42: #{tpu_custom_call.1} parent=1 // pred_check
      _
    $region43: #{tpu_custom_call.1} parent=1 // pred_check_branch
      %1042 = sbr.rel (0) target = $region45
    $region44: #{tpu_custom_call.1} parent=1 // pred_region
      %1043 = dma.done [#allocation4], 4096
    $region45: #{tpu_custom_call.1} parent=1 // pred_fallthru
      _
    // Predicated region
    $region46: #{tpu_custom_call.1} parent=1 // pred_check
      _
    $region47: #{tpu_custom_call.1} parent=1 // pred_check_branch
      %1045 = sbr.rel (0) target = $region49
    $region48: #{tpu_custom_call.1} parent=1 // pred_region
      %1046 = dma.done [#allocation10], 4096
    $region49: #{tpu_custom_call.1} parent=1 // pred_fallthru
      _
    %1047 = vsyncpa [#allocation3], 1
    %1048 = vsyncpa [#allocation6], 1
    %1049 = vsyncpa [#allocation4], 1
    %1050 = vsyncpa [#allocation10], 1

</llo_original>
